<compile_context>
chip_gen: v7x
topology: tpu7x:2x2x1
jax: 0.10.0
libtpu: 0.0.40
codegen_flags: <defaults>
</compile_context>

<pallas_src>
import functools
import os
from dataclasses import dataclass

import jax
import jax.numpy as jnp
from jax.experimental import pallas as pl
from jax.experimental.pallas import tpu as pltpu


@dataclass
class PdInput:
    """JAX analog of the PyTorch PdInput wrapper (name + table data)."""
    name: str
    data: jax.Array

    def transform(self, data: jax.Array) -> "PdInput":
        return PdInput(name=self.name, data=data)


# ---------------------------------------------------------------------------
# Hardware heuristics (safe fallbacks; never raise).
# ---------------------------------------------------------------------------
def _num_tensorcores() -> int:
    try:
        kind = jax.devices()[0].device_kind.lower()
        if "v7" in kind:
            return 2  # v7x: 2 TensorCores per chip share HBM
    except Exception:
        pass
    return 1


def _default_block_bytes() -> int:
    try:
        kind = jax.devices()[0].device_kind.lower()
        if "v5 lite" in kind or "v5e" in kind or "v5lite" in kind:
            return 2 << 20  # 2 MiB: 2 arrays x 2 bufs = 8 MiB < v5e 16 MiB scoped default
    except Exception:
        pass
    return 4 << 20          # 4 MiB: 16 MiB total, under v6e/v7x 32 MiB scoped default


def _split_bounds(n: int, parts: int):
    """n split into `parts` contiguous, nearly equal ranges -> bounds list."""
    base, rem = divmod(n, parts)
    bounds = [0]
    for p in range(parts):
        bounds.append(bounds[-1] + base + (1 if p < rem else 0))
    return bounds


# ---------------------------------------------------------------------------
# Path A: HBM -> HBM copy via K concurrent DMA descriptors.
# ---------------------------------------------------------------------------
def _make_multi_dma_kernel(bounds):
    """Grid-less kernel: one TC issues len(bounds)-1 concurrent slice DMAs."""
    n_shards = len(bounds) - 1

    def kernel(src_hbm, dst_hbm, sems):
        copies = []
        for k in range(n_shards):
            s, e = bounds[k], bounds[k + 1]
            cp = pltpu.make_async_copy(src_hbm.at[s:e], dst_hbm.at[s:e], sems.at[k])
            cp.start()
            copies.append(cp)
        for cp in copies:
            cp.wait()

    return kernel, n_shards


def _make_sharded_dma_kernel(core_shards):
    """grid=(n_cores,) kernel: each TensorCore issues DMAs for its row ranges."""
    n_cores = len(core_shards)
    max_shards = max(len(s) for s in core_shards)

    def kernel(src_hbm, dst_hbm, sems):
        core = pl.program_id(0)
        for c in range(n_cores):
            @pl.when(core == c)
            def _(c=c):
                copies = []
                for j, (s, e) in enumerate(core_shards[c]):
                    cp = pltpu.make_async_copy(
                        src_hbm.at[s:e], dst_hbm.at[s:e], sems.at[c, j])
                    cp.start()
                    copies.append(cp)
                for cp in copies:
                    cp.wait()

    return kernel, n_cores, max_shards


def _copy_bulk_dma(table: jax.Array, *, num_shards: int = 8,
                   num_cores: int | None = None) -> jax.Array:
    rows = table.shape[0]
    if num_cores is None:
        num_cores = _num_tensorcores()
    num_cores = max(1, min(num_cores, rows))
    num_shards = max(num_cores, min(num_shards, rows))

    if num_cores == 1:
        bounds = _split_bounds(rows, num_shards)
        kernel, n_shards = _make_multi_dma_kernel(bounds)
        return pl.pallas_call(
            kernel,
            out_shape=jax.ShapeDtypeStruct(table.shape, table.dtype),
            in_specs=[pl.BlockSpec(memory_space=pl.ANY)],
            out_specs=pl.BlockSpec(memory_space=pl.ANY),
            scratch_shapes=[pltpu.SemaphoreType.DMA((n_shards,))],
        )(table)

    # v7x: shard the row ranges across the 2 TensorCores (parallel grid axis),
    # each core issuing its own batch of concurrent DMA descriptors.
    core_bounds = _split_bounds(rows, num_cores)
    shards_per_core = max(1, num_shards // num_cores)
    core_shards = []
    for c in range(num_cores):
        lo, hi = core_bounds[c], core_bounds[c + 1]
        b = _split_bounds(hi - lo, shards_per_core)
        core_shards.append(
            [(lo + b[j], lo + b[j + 1]) for j in range(shards_per_core)
             if b[j + 1] > b[j]])
    kernel, n_cores, max_shards = _make_sharded_dma_kernel(core_shards)
    return pl.pallas_call(
        kernel,
        out_shape=jax.ShapeDtypeStruct(table.shape, table.dtype),
        grid=(n_cores,),
        in_specs=[pl.BlockSpec(memory_space=pl.ANY)],
        out_specs=pl.BlockSpec(memory_space=pl.ANY),
        scratch_shapes=[pltpu.SemaphoreType.DMA((n_cores, max_shards))],
        compiler_params=pltpu.CompilerParams(dimension_semantics=("parallel",)),
    )(table)


# ---------------------------------------------------------------------------
# Path B: tiled streaming copy through VMEM directly on the 2-D table.
# Last block dim = full column count (legal regardless of 128 divisibility),
# row blocks are multiples of 8 sublanes, grid = cdiv(rows, block_rows) so the
# trailing partial block is masked by Pallas — no pad/reshape/slice passes.
# Optional fused elementwise work (NaN scrub) rides in otherwise-idle VPU slots.
# ---------------------------------------------------------------------------
_SUBLANES = 8


def _tiled_copy_kernel(src_ref, dst_ref, *, scrub_nan: bool):
    x = src_ref[...]
    if scrub_nan:
        x = jnp.where(jnp.isnan(x), jnp.zeros_like(x), x)
    dst_ref[...] = x


def _copy_tiled_vmem(table: jax.Array, *, target_block_bytes: int | None = None,
                     scrub_nan: bool = False) -> jax.Array:
    if target_block_bytes is None:
        target_block_bytes = _default_block_bytes()

    orig_shape = table.shape
    if table.ndim != 2:
        # CSV tables are 2-D; collapse/expand other ranks to a 2-D view.
        last = orig_shape[-1] if table.ndim >= 1 else 1
        table = table.reshape(-1, max(1, last))
    rows, cols = table.shape
    itemsize = table.dtype.itemsize

    scrub = scrub_nan and jnp.issubdtype(table.dtype, jnp.floating)

    max_rows_per_block = max(1, target_block_bytes // max(1, cols * itemsize))
    if max_rows_per_block >= rows:
        block_rows = rows                         # single full-extent block
    else:
        block_rows = max(_SUBLANES,
                         (max_rows_per_block // _SUBLANES) * _SUBLANES)
        block_rows = min(block_rows, rows)        # divisible by 8 or == rows

    grid = (pl.cdiv(rows, block_rows),)
    out = pl.pallas_call(
        functools.partial(_tiled_copy_kernel, scrub_nan=scrub),
        out_shape=jax.ShapeDtypeStruct((rows, cols), table.dtype),
        grid=grid,
        in_specs=[pl.BlockSpec((block_rows, cols), lambda i: (i, 0))],
        out_specs=pl.BlockSpec((block_rows, cols), lambda i: (i, 0)),
        compiler_params=pltpu.CompilerParams(
            dimension_semantics=("parallel",)),   # shards across v7x's 2 TCs
    )(table)

    return out.reshape(orig_shape)


# ---------------------------------------------------------------------------
# Public entry point + ReadCSV module analog
# ---------------------------------------------------------------------------
def read_table_pallas(table: jax.Array, *, method: str = "dma",
                      min_kernel_bytes: int = 1 << 20,
                      scrub_nan: bool = False,
                      target_block_bytes: int | None = None) -> jax.Array:
    """Materialize the parsed numeric table on device.

    Fast path: below `min_kernel_bytes` (and with no fused work requested) the
    input array is returned directly — "don't copy" is the biggest win for a
    bandwidth-bound identity op, and JAX arrays are immutable so semantics hold.

    method="dma":   HBM->HBM copy via concurrent DMA descriptors (any dtype).
    method="tiled": streaming copy through VMEM; supports fused NaN scrubbing.
    """
    if table.size == 0 or table.ndim == 0:
        return table
    nbytes = table.size * table.dtype.itemsize
    if scrub_nan:
        method = "tiled"                       # scrub needs the VPU path
    elif nbytes < min_kernel_bytes:
        return table                           # no-copy fast path
    if method == "dma":
        return _copy_bulk_dma(table)
    if method == "tiled":
        return _copy_tiled_vmem(table, scrub_nan=scrub_nan,
                                target_block_bytes=target_block_bytes)
    raise ValueError(f"unknown method: {method!r}")


class ReadCSV:
    """JAX/Pallas analog of the PyTorch ReadCSV module.

    Instead of parsing a file from disk, the caller supplies the already
    numeric table (what pandas would produce for an all-numeric CSV); the
    device materialization is done by the Pallas kernel(s) above.
    """

    def __init__(self, name: str):
        self.df_name = name

    def forward(self, fn: str, table: jax.Array, **kwargs) -> PdInput:
        # Host-side string glue, matching: self.df_name + ':' + basename(fn)
        name = self.df_name + ":" + os.path.basename(fn)
        data = read_table_pallas(table, **kwargs)
        return PdInput(name=name, data=data)

    __call__ = forward


if __name__ == "__main__":
    k0, k1 = jax.random.split(jax.random.PRNGKey(0))

    # Small, ragged table (33 rows x 9 numeric columns) — the kind of shape a
    # real all-numeric CSV produces (not a multiple of 8 or 128).
    rows, cols = 33, 9
    table = jax.random.normal(k0, (rows, cols), dtype=jnp.float32)

    module = ReadCSV(name="my_df")

    # Default: tiny-table fast path (no copy).
    out = module("/some/path/data.csv", table)
    jax.block_until_ready(out.data)
    assert out.name == "my_df:data.csv"
    assert out.data.shape == (rows, cols) and out.data.dtype == jnp.float32
    assert bool(jnp.allclose(out.data, table))

    # Path A forced on the small table: multi-descriptor HBM->HBM DMA.
    out_dma = read_table_pallas(table, method="dma", min_kernel_bytes=0)
    jax.block_until_ready(out_dma)
    assert bool(jnp.allclose(out_dma, table))

    # Path B forced on the small table: single full-extent block.
    out_tl = read_table_pallas(table, method="tiled", min_kernel_bytes=0)
    jax.block_until_ready(out_tl)
    assert bool(jnp.allclose(out_tl, table))

    # Larger ragged table (4097 x 129 f32, ~2.1 MiB) exercises multi-shard DMA
    # and, with a 1 MiB block target, a multi-block grid with a masked partial
    # trailing block (no pad/reshape passes anywhere).
    big = jax.random.normal(k1, (4097, 129), dtype=jnp.float32)
    out_big_dma = read_table_pallas(big, method="dma", min_kernel_bytes=0)
    out_big_tl = read_table_pallas(big, method="tiled", min_kernel_bytes=0,
                                   target_block_bytes=1 << 20)
    jax.block_until_ready((out_big_dma, out_big_tl))
    assert out_big_dma.shape == big.shape and out_big_tl.shape == big.shape
    assert bool(jnp.allclose(out_big_dma, big))
    assert bool(jnp.allclose(out_big_tl, big))

    # Fused elementwise work (NaN scrub of the "parsed CSV") on the tiled path.
    dirty = big.at[::7, ::5].set(jnp.nan)
    out_clean = read_table_pallas(dirty, scrub_nan=True, min_kernel_bytes=0)
    jax.block_until_ready(out_clean)
    ref_clean = jnp.where(jnp.isnan(dirty), 0.0, dirty)
    assert not bool(jnp.any(jnp.isnan(out_clean)))
    assert bool(jnp.allclose(out_clean, ref_clean))

    print("KERNEL_OK")
</pallas_src>

<mosaic_0001>
module attributes {stable_mosaic.version = 11 : i64} {
  func.func @kernel(%arg0: memref<33x9xf32, #tpu.memory_space<any>>, %arg1: memref<33x9xf32, #tpu.memory_space<any>>, %arg2: memref<8x!tpu.dma_semaphore, #tpu.memory_space<semaphore_mem>>) attributes {dimension_semantics = [], scalar_prefetch = 0 : i64, scratch_operands = 1 : i64, tpu.core_type = #tpu.core_type<tc>} {
    %c0_i32 = arith.constant 0 : i32
    %c0_i32_0 = arith.constant 0 : i32
    %c0_i32_1 = arith.constant 0 : i32
    %0 = tpu.memref_slice %arg0[%c0_i32_0, %c0_i32_1] : memref<33x9xf32, #tpu.memory_space<any>> -> memref<5x9xf32, #tpu.memory_space<any>>
    %c0_i32_2 = arith.constant 0 : i32
    %c0_i32_3 = arith.constant 0 : i32
    %1 = tpu.memref_slice %arg1[%c0_i32_2, %c0_i32_3] : memref<33x9xf32, #tpu.memory_space<any>> -> memref<5x9xf32, #tpu.memory_space<any>>
    %2 = tpu.memref_slice %arg2[%c0_i32] : memref<8x!tpu.dma_semaphore, #tpu.memory_space<semaphore_mem>> -> memref<1x!tpu.dma_semaphore, #tpu.memory_space<semaphore_mem>>
    %3 = tpu.memref_squeeze %2 : memref<1x!tpu.dma_semaphore, #tpu.memory_space<semaphore_mem>> -> memref<!tpu.dma_semaphore, #tpu.memory_space<semaphore_mem>>
    tpu.enqueue_dma source(%0 : memref<5x9xf32, #tpu.memory_space<any>>) target(%1 : memref<5x9xf32, #tpu.memory_space<any>>) target_semaphore(%3 : memref<!tpu.dma_semaphore, #tpu.memory_space<semaphore_mem>>)
    %c1_i32 = arith.constant 1 : i32
    %c5_i32 = arith.constant 5 : i32
    %c0_i32_4 = arith.constant 0 : i32
    %4 = tpu.memref_slice %arg0[%c5_i32, %c0_i32_4] : memref<33x9xf32, #tpu.memory_space<any>> -> memref<4x9xf32, #tpu.memory_space<any>>
    %c5_i32_5 = arith.constant 5 : i32
    %c0_i32_6 = arith.constant 0 : i32
    %5 = tpu.memref_slice %arg1[%c5_i32_5, %c0_i32_6] : memref<33x9xf32, #tpu.memory_space<any>> -> memref<4x9xf32, #tpu.memory_space<any>>
    %6 = tpu.memref_slice %arg2[%c1_i32] : memref<8x!tpu.dma_semaphore, #tpu.memory_space<semaphore_mem>> -> memref<1x!tpu.dma_semaphore, #tpu.memory_space<semaphore_mem>>
    %7 = tpu.memref_squeeze %6 : memref<1x!tpu.dma_semaphore, #tpu.memory_space<semaphore_mem>> -> memref<!tpu.dma_semaphore, #tpu.memory_space<semaphore_mem>>
    tpu.enqueue_dma source(%4 : memref<4x9xf32, #tpu.memory_space<any>>) target(%5 : memref<4x9xf32, #tpu.memory_space<any>>) target_semaphore(%7 : memref<!tpu.dma_semaphore, #tpu.memory_space<semaphore_mem>>)
    %c2_i32 = arith.constant 2 : i32
    %c9_i32 = arith.constant 9 : i32
    %c0_i32_7 = arith.constant 0 : i32
    %8 = tpu.memref_slice %arg0[%c9_i32, %c0_i32_7] : memref<33x9xf32, #tpu.memory_space<any>> -> memref<4x9xf32, #tpu.memory_space<any>>
    %c9_i32_8 = arith.constant 9 : i32
    %c0_i32_9 = arith.constant 0 : i32
    %9 = tpu.memref_slice %arg1[%c9_i32_8, %c0_i32_9] : memref<33x9xf32, #tpu.memory_space<any>> -> memref<4x9xf32, #tpu.memory_space<any>>
    %10 = tpu.memref_slice %arg2[%c2_i32] : memref<8x!tpu.dma_semaphore, #tpu.memory_space<semaphore_mem>> -> memref<1x!tpu.dma_semaphore, #tpu.memory_space<semaphore_mem>>
    %11 = tpu.memref_squeeze %10 : memref<1x!tpu.dma_semaphore, #tpu.memory_space<semaphore_mem>> -> memref<!tpu.dma_semaphore, #tpu.memory_space<semaphore_mem>>
    tpu.enqueue_dma source(%8 : memref<4x9xf32, #tpu.memory_space<any>>) target(%9 : memref<4x9xf32, #tpu.memory_space<any>>) target_semaphore(%11 : memref<!tpu.dma_semaphore, #tpu.memory_space<semaphore_mem>>)
    %c3_i32 = arith.constant 3 : i32
    %c13_i32 = arith.constant 13 : i32
    %c0_i32_10 = arith.constant 0 : i32
    %12 = tpu.memref_slice %arg0[%c13_i32, %c0_i32_10] : memref<33x9xf32, #tpu.memory_space<any>> -> memref<4x9xf32, #tpu.memory_space<any>>
    %c13_i32_11 = arith.constant 13 : i32
    %c0_i32_12 = arith.constant 0 : i32
    %13 = tpu.memref_slice %arg1[%c13_i32_11, %c0_i32_12] : memref<33x9xf32, #tpu.memory_space<any>> -> memref<4x9xf32, #tpu.memory_space<any>>
    %14 = tpu.memref_slice %arg2[%c3_i32] : memref<8x!tpu.dma_semaphore, #tpu.memory_space<semaphore_mem>> -> memref<1x!tpu.dma_semaphore, #tpu.memory_space<semaphore_mem>>
    %15 = tpu.memref_squeeze %14 : memref<1x!tpu.dma_semaphore, #tpu.memory_space<semaphore_mem>> -> memref<!tpu.dma_semaphore, #tpu.memory_space<semaphore_mem>>
    tpu.enqueue_dma source(%12 : memref<4x9xf32, #tpu.memory_space<any>>) target(%13 : memref<4x9xf32, #tpu.memory_space<any>>) target_semaphore(%15 : memref<!tpu.dma_semaphore, #tpu.memory_space<semaphore_mem>>)
    %c4_i32 = arith.constant 4 : i32
    %c17_i32 = arith.constant 17 : i32
    %c0_i32_13 = arith.constant 0 : i32
    %16 = tpu.memref_slice %arg0[%c17_i32, %c0_i32_13] : memref<33x9xf32, #tpu.memory_space<any>> -> memref<4x9xf32, #tpu.memory_space<any>>
    %c17_i32_14 = arith.constant 17 : i32
    %c0_i32_15 = arith.constant 0 : i32
    %17 = tpu.memref_slice %arg1[%c17_i32_14, %c0_i32_15] : memref<33x9xf32, #tpu.memory_space<any>> -> memref<4x9xf32, #tpu.memory_space<any>>
    %18 = tpu.memref_slice %arg2[%c4_i32] : memref<8x!tpu.dma_semaphore, #tpu.memory_space<semaphore_mem>> -> memref<1x!tpu.dma_semaphore, #tpu.memory_space<semaphore_mem>>
    %19 = tpu.memref_squeeze %18 : memref<1x!tpu.dma_semaphore, #tpu.memory_space<semaphore_mem>> -> memref<!tpu.dma_semaphore, #tpu.memory_space<semaphore_mem>>
    tpu.enqueue_dma source(%16 : memref<4x9xf32, #tpu.memory_space<any>>) target(%17 : memref<4x9xf32, #tpu.memory_space<any>>) target_semaphore(%19 : memref<!tpu.dma_semaphore, #tpu.memory_space<semaphore_mem>>)
    %c5_i32_16 = arith.constant 5 : i32
    %c21_i32 = arith.constant 21 : i32
    %c0_i32_17 = arith.constant 0 : i32
    %20 = tpu.memref_slice %arg0[%c21_i32, %c0_i32_17] : memref<33x9xf32, #tpu.memory_space<any>> -> memref<4x9xf32, #tpu.memory_space<any>>
    %c21_i32_18 = arith.constant 21 : i32
    %c0_i32_19 = arith.constant 0 : i32
    %21 = tpu.memref_slice %arg1[%c21_i32_18, %c0_i32_19] : memref<33x9xf32, #tpu.memory_space<any>> -> memref<4x9xf32, #tpu.memory_space<any>>
    %22 = tpu.memref_slice %arg2[%c5_i32_16] : memref<8x!tpu.dma_semaphore, #tpu.memory_space<semaphore_mem>> -> memref<1x!tpu.dma_semaphore, #tpu.memory_space<semaphore_mem>>
    %23 = tpu.memref_squeeze %22 : memref<1x!tpu.dma_semaphore, #tpu.memory_space<semaphore_mem>> -> memref<!tpu.dma_semaphore, #tpu.memory_space<semaphore_mem>>
    tpu.enqueue_dma source(%20 : memref<4x9xf32, #tpu.memory_space<any>>) target(%21 : memref<4x9xf32, #tpu.memory_space<any>>) target_semaphore(%23 : memref<!tpu.dma_semaphore, #tpu.memory_space<semaphore_mem>>)
    %c6_i32 = arith.constant 6 : i32
    %c25_i32 = arith.constant 25 : i32
    %c0_i32_20 = arith.constant 0 : i32
    %24 = tpu.memref_slice %arg0[%c25_i32, %c0_i32_20] : memref<33x9xf32, #tpu.memory_space<any>> -> memref<4x9xf32, #tpu.memory_space<any>>
    %c25_i32_21 = arith.constant 25 : i32
    %c0_i32_22 = arith.constant 0 : i32
    %25 = tpu.memref_slice %arg1[%c25_i32_21, %c0_i32_22] : memref<33x9xf32, #tpu.memory_space<any>> -> memref<4x9xf32, #tpu.memory_space<any>>
    %26 = tpu.memref_slice %arg2[%c6_i32] : memref<8x!tpu.dma_semaphore, #tpu.memory_space<semaphore_mem>> -> memref<1x!tpu.dma_semaphore, #tpu.memory_space<semaphore_mem>>
    %27 = tpu.memref_squeeze %26 : memref<1x!tpu.dma_semaphore, #tpu.memory_space<semaphore_mem>> -> memref<!tpu.dma_semaphore, #tpu.memory_space<semaphore_mem>>
    tpu.enqueue_dma source(%24 : memref<4x9xf32, #tpu.memory_space<any>>) target(%25 : memref<4x9xf32, #tpu.memory_space<any>>) target_semaphore(%27 : memref<!tpu.dma_semaphore, #tpu.memory_space<semaphore_mem>>)
    %c7_i32 = arith.constant 7 : i32
    %c29_i32 = arith.constant 29 : i32
    %c0_i32_23 = arith.constant 0 : i32
    %28 = tpu.memref_slice %arg0[%c29_i32, %c0_i32_23] : memref<33x9xf32, #tpu.memory_space<any>> -> memref<4x9xf32, #tpu.memory_space<any>>
    %c29_i32_24 = arith.constant 29 : i32
    %c0_i32_25 = arith.constant 0 : i32
    %29 = tpu.memref_slice %arg1[%c29_i32_24, %c0_i32_25] : memref<33x9xf32, #tpu.memory_space<any>> -> memref<4x9xf32, #tpu.memory_space<any>>
    %30 = tpu.memref_slice %arg2[%c7_i32] : memref<8x!tpu.dma_semaphore, #tpu.memory_space<semaphore_mem>> -> memref<1x!tpu.dma_semaphore, #tpu.memory_space<semaphore_mem>>
    %31 = tpu.memref_squeeze %30 : memref<1x!tpu.dma_semaphore, #tpu.memory_space<semaphore_mem>> -> memref<!tpu.dma_semaphore, #tpu.memory_space<semaphore_mem>>
    tpu.enqueue_dma source(%28 : memref<4x9xf32, #tpu.memory_space<any>>) target(%29 : memref<4x9xf32, #tpu.memory_space<any>>) target_semaphore(%31 : memref<!tpu.dma_semaphore, #tpu.memory_space<semaphore_mem>>)
    %c0_i32_26 = arith.constant 0 : i32
    %c0_i32_27 = arith.constant 0 : i32
    %c0_i32_28 = arith.constant 0 : i32
    %32 = tpu.memref_slice %arg0[%c0_i32_27, %c0_i32_28] : memref<33x9xf32, #tpu.memory_space<any>> -> memref<5x9xf32, #tpu.memory_space<any>>
    %c0_i32_29 = arith.constant 0 : i32
    %c0_i32_30 = arith.constant 0 : i32
    %33 = tpu.memref_slice %arg1[%c0_i32_29, %c0_i32_30] : memref<33x9xf32, #tpu.memory_space<any>> -> memref<5x9xf32, #tpu.memory_space<any>>
    %34 = tpu.memref_slice %arg2[%c0_i32_26] : memref<8x!tpu.dma_semaphore, #tpu.memory_space<semaphore_mem>> -> memref<1x!tpu.dma_semaphore, #tpu.memory_space<semaphore_mem>>
    %35 = tpu.memref_squeeze %34 : memref<1x!tpu.dma_semaphore, #tpu.memory_space<semaphore_mem>> -> memref<!tpu.dma_semaphore, #tpu.memory_space<semaphore_mem>>
    tpu.wait_dma2 semaphore(%35 : memref<!tpu.dma_semaphore, #tpu.memory_space<semaphore_mem>>) src(%32 : memref<5x9xf32, #tpu.memory_space<any>>) dst(%33 : memref<5x9xf32, #tpu.memory_space<any>>)
    %c1_i32_31 = arith.constant 1 : i32
    %c5_i32_32 = arith.constant 5 : i32
    %c0_i32_33 = arith.constant 0 : i32
    %36 = tpu.memref_slice %arg0[%c5_i32_32, %c0_i32_33] : memref<33x9xf32, #tpu.memory_space<any>> -> memref<4x9xf32, #tpu.memory_space<any>>
    %c5_i32_34 = arith.constant 5 : i32
    %c0_i32_35 = arith.constant 0 : i32
    %37 = tpu.memref_slice %arg1[%c5_i32_34, %c0_i32_35] : memref<33x9xf32, #tpu.memory_space<any>> -> memref<4x9xf32, #tpu.memory_space<any>>
    %38 = tpu.memref_slice %arg2[%c1_i32_31] : memref<8x!tpu.dma_semaphore, #tpu.memory_space<semaphore_mem>> -> memref<1x!tpu.dma_semaphore, #tpu.memory_space<semaphore_mem>>
    %39 = tpu.memref_squeeze %38 : memref<1x!tpu.dma_semaphore, #tpu.memory_space<semaphore_mem>> -> memref<!tpu.dma_semaphore, #tpu.memory_space<semaphore_mem>>
    tpu.wait_dma2 semaphore(%39 : memref<!tpu.dma_semaphore, #tpu.memory_space<semaphore_mem>>) src(%36 : memref<4x9xf32, #tpu.memory_space<any>>) dst(%37 : memref<4x9xf32, #tpu.memory_space<any>>)
    %c2_i32_36 = arith.constant 2 : i32
    %c9_i32_37 = arith.constant 9 : i32
    %c0_i32_38 = arith.constant 0 : i32
    %40 = tpu.memref_slice %arg0[%c9_i32_37, %c0_i32_38] : memref<33x9xf32, #tpu.memory_space<any>> -> memref<4x9xf32, #tpu.memory_space<any>>
    %c9_i32_39 = arith.constant 9 : i32
    %c0_i32_40 = arith.constant 0 : i32
    %41 = tpu.memref_slice %arg1[%c9_i32_39, %c0_i32_40] : memref<33x9xf32, #tpu.memory_space<any>> -> memref<4x9xf32, #tpu.memory_space<any>>
    %42 = tpu.memref_slice %arg2[%c2_i32_36] : memref<8x!tpu.dma_semaphore, #tpu.memory_space<semaphore_mem>> -> memref<1x!tpu.dma_semaphore, #tpu.memory_space<semaphore_mem>>
    %43 = tpu.memref_squeeze %42 : memref<1x!tpu.dma_semaphore, #tpu.memory_space<semaphore_mem>> -> memref<!tpu.dma_semaphore, #tpu.memory_space<semaphore_mem>>
    tpu.wait_dma2 semaphore(%43 : memref<!tpu.dma_semaphore, #tpu.memory_space<semaphore_mem>>) src(%40 : memref<4x9xf32, #tpu.memory_space<any>>) dst(%41 : memref<4x9xf32, #tpu.memory_space<any>>)
    %c3_i32_41 = arith.constant 3 : i32
    %c13_i32_42 = arith.constant 13 : i32
    %c0_i32_43 = arith.constant 0 : i32
    %44 = tpu.memref_slice %arg0[%c13_i32_42, %c0_i32_43] : memref<33x9xf32, #tpu.memory_space<any>> -> memref<4x9xf32, #tpu.memory_space<any>>
    %c13_i32_44 = arith.constant 13 : i32
    %c0_i32_45 = arith.constant 0 : i32
    %45 = tpu.memref_slice %arg1[%c13_i32_44, %c0_i32_45] : memref<33x9xf32, #tpu.memory_space<any>> -> memref<4x9xf32, #tpu.memory_space<any>>
    %46 = tpu.memref_slice %arg2[%c3_i32_41] : memref<8x!tpu.dma_semaphore, #tpu.memory_space<semaphore_mem>> -> memref<1x!tpu.dma_semaphore, #tpu.memory_space<semaphore_mem>>
    %47 = tpu.memref_squeeze %46 : memref<1x!tpu.dma_semaphore, #tpu.memory_space<semaphore_mem>> -> memref<!tpu.dma_semaphore, #tpu.memory_space<semaphore_mem>>
    tpu.wait_dma2 semaphore(%47 : memref<!tpu.dma_semaphore, #tpu.memory_space<semaphore_mem>>) src(%44 : memref<4x9xf32, #tpu.memory_space<any>>) dst(%45 : memref<4x9xf32, #tpu.memory_space<any>>)
    %c4_i32_46 = arith.constant 4 : i32
    %c17_i32_47 = arith.constant 17 : i32
    %c0_i32_48 = arith.constant 0 : i32
    %48 = tpu.memref_slice %arg0[%c17_i32_47, %c0_i32_48] : memref<33x9xf32, #tpu.memory_space<any>> -> memref<4x9xf32, #tpu.memory_space<any>>
    %c17_i32_49 = arith.constant 17 : i32
    %c0_i32_50 = arith.constant 0 : i32
    %49 = tpu.memref_slice %arg1[%c17_i32_49, %c0_i32_50] : memref<33x9xf32, #tpu.memory_space<any>> -> memref<4x9xf32, #tpu.memory_space<any>>
    %50 = tpu.memref_slice %arg2[%c4_i32_46] : memref<8x!tpu.dma_semaphore, #tpu.memory_space<semaphore_mem>> -> memref<1x!tpu.dma_semaphore, #tpu.memory_space<semaphore_mem>>
    %51 = tpu.memref_squeeze %50 : memref<1x!tpu.dma_semaphore, #tpu.memory_space<semaphore_mem>> -> memref<!tpu.dma_semaphore, #tpu.memory_space<semaphore_mem>>
    tpu.wait_dma2 semaphore(%51 : memref<!tpu.dma_semaphore, #tpu.memory_space<semaphore_mem>>) src(%48 : memref<4x9xf32, #tpu.memory_space<any>>) dst(%49 : memref<4x9xf32, #tpu.memory_space<any>>)
    %c5_i32_51 = arith.constant 5 : i32
    %c21_i32_52 = arith.constant 21 : i32
    %c0_i32_53 = arith.constant 0 : i32
    %52 = tpu.memref_slice %arg0[%c21_i32_52, %c0_i32_53] : memref<33x9xf32, #tpu.memory_space<any>> -> memref<4x9xf32, #tpu.memory_space<any>>
    %c21_i32_54 = arith.constant 21 : i32
    %c0_i32_55 = arith.constant 0 : i32
    %53 = tpu.memref_slice %arg1[%c21_i32_54, %c0_i32_55] : memref<33x9xf32, #tpu.memory_space<any>> -> memref<4x9xf32, #tpu.memory_space<any>>
    %54 = tpu.memref_slice %arg2[%c5_i32_51] : memref<8x!tpu.dma_semaphore, #tpu.memory_space<semaphore_mem>> -> memref<1x!tpu.dma_semaphore, #tpu.memory_space<semaphore_mem>>
    %55 = tpu.memref_squeeze %54 : memref<1x!tpu.dma_semaphore, #tpu.memory_space<semaphore_mem>> -> memref<!tpu.dma_semaphore, #tpu.memory_space<semaphore_mem>>
    tpu.wait_dma2 semaphore(%55 : memref<!tpu.dma_semaphore, #tpu.memory_space<semaphore_mem>>) src(%52 : memref<4x9xf32, #tpu.memory_space<any>>) dst(%53 : memref<4x9xf32, #tpu.memory_space<any>>)
    %c6_i32_56 = arith.constant 6 : i32
    %c25_i32_57 = arith.constant 25 : i32
    %c0_i32_58 = arith.constant 0 : i32
    %56 = tpu.memref_slice %arg0[%c25_i32_57, %c0_i32_58] : memref<33x9xf32, #tpu.memory_space<any>> -> memref<4x9xf32, #tpu.memory_space<any>>
    %c25_i32_59 = arith.constant 25 : i32
    %c0_i32_60 = arith.constant 0 : i32
    %57 = tpu.memref_slice %arg1[%c25_i32_59, %c0_i32_60] : memref<33x9xf32, #tpu.memory_space<any>> -> memref<4x9xf32, #tpu.memory_space<any>>
    %58 = tpu.memref_slice %arg2[%c6_i32_56] : memref<8x!tpu.dma_semaphore, #tpu.memory_space<semaphore_mem>> -> memref<1x!tpu.dma_semaphore, #tpu.memory_space<semaphore_mem>>
    %59 = tpu.memref_squeeze %58 : memref<1x!tpu.dma_semaphore, #tpu.memory_space<semaphore_mem>> -> memref<!tpu.dma_semaphore, #tpu.memory_space<semaphore_mem>>
    tpu.wait_dma2 semaphore(%59 : memref<!tpu.dma_semaphore, #tpu.memory_space<semaphore_mem>>) src(%56 : memref<4x9xf32, #tpu.memory_space<any>>) dst(%57 : memref<4x9xf32, #tpu.memory_space<any>>)
    %c7_i32_61 = arith.constant 7 : i32
    %c29_i32_62 = arith.constant 29 : i32
    %c0_i32_63 = arith.constant 0 : i32
    %60 = tpu.memref_slice %arg0[%c29_i32_62, %c0_i32_63] : memref<33x9xf32, #tpu.memory_space<any>> -> memref<4x9xf32, #tpu.memory_space<any>>
    %c29_i32_64 = arith.constant 29 : i32
    %c0_i32_65 = arith.constant 0 : i32
    %61 = tpu.memref_slice %arg1[%c29_i32_64, %c0_i32_65] : memref<33x9xf32, #tpu.memory_space<any>> -> memref<4x9xf32, #tpu.memory_space<any>>
    %62 = tpu.memref_slice %arg2[%c7_i32_61] : memref<8x!tpu.dma_semaphore, #tpu.memory_space<semaphore_mem>> -> memref<1x!tpu.dma_semaphore, #tpu.memory_space<semaphore_mem>>
    %63 = tpu.memref_squeeze %62 : memref<1x!tpu.dma_semaphore, #tpu.memory_space<semaphore_mem>> -> memref<!tpu.dma_semaphore, #tpu.memory_space<semaphore_mem>>
    tpu.wait_dma2 semaphore(%63 : memref<!tpu.dma_semaphore, #tpu.memory_space<semaphore_mem>>) src(%60 : memref<4x9xf32, #tpu.memory_space<any>>) dst(%61 : memref<4x9xf32, #tpu.memory_space<any>>)
    return
  }
}

</mosaic_0001>

<llo_original>
// kernel: tpu_custom_call.1
$region0: #{tpu_custom_call.1}
  #allocation0 [shape = 'u32[]', space=smem, size = 0x4, offset = 0x4, fixed_abs, tag = 'smem constant byte address 0x4 - core index']
  #allocation1 [shape = 'u32[144,128]{1,0:T(1,128)}', space=vmem, size = 0x12000, scoped, tag = 'internal scratch']
  #allocation2 [shape = 's32[8]{0}', space=sflag, size = 0x20, scoped, tag = 'scratch operand']
  #allocation3 [shape = 's32[]', space=sflag, size = 0x4, offset = 0, fixed_abs, tag = 'sflag constant byte address 0x0 - dummy sync flag']
  #allocation4 [shape = 's32[]', space=sflag, size = 0x4, offset = 0, fixed_abs, tag = 'sflag constant byte address 0x0 - dummy sync flag']
  #allocation5 [shape = 's32[]', space=sflag, size = 0x4, offset = 0, fixed_abs, tag = 'sflag constant byte address 0x0 - dummy sync flag']
  #allocation6 [shape = 's32[]', space=sflag, size = 0x4, offset = 0, fixed_abs, tag = 'sflag constant byte address 0x0 - dummy sync flag']
  #allocation7 [shape = 's32[]', space=sflag, size = 0x4, offset = 0, fixed_abs, tag = 'sflag constant byte address 0x0 - dummy sync flag']
  #allocation8 [shape = 's32[]', space=sflag, size = 0x4, offset = 0, fixed_abs, tag = 'sflag constant byte address 0x0 - dummy sync flag']
  #allocation9 [shape = 's32[]', space=sflag, size = 0x4, offset = 0, fixed_abs, tag = 'sflag constant byte address 0x0 - dummy sync flag']
  #allocation10 [shape = 's32[]', space=sflag, size = 0x4, offset = 0, fixed_abs, tag = 'sflag constant byte address 0x0 - dummy sync flag']
  %s0 = inlined_call_operand.vmem [shape: f32[33,9], index: 0, kind: input, shape index: {}]
  %s1 = inlined_call_operand.vmem [shape: f32[33,9], index: 1, kind: output, shape index: {}]
  %s2 = sld [smem:[#allocation0]]
  $region242: #{tpu_custom_call.1} parent=0
    _
  %s4 = ssub.s32 1, %s2
  %s5 = scalar_select 0, %s4, %s2
  %p7 = scmp.lt.u32.totalorder 5, 8
  %p8 = pneg %p7
  // Predicated region
  $region2: #{tpu_custom_call.1} parent=0 // pred_check
    _
  $region3: #{tpu_custom_call.1} parent=0 // pred_check_branch
    %10 = sbr.rel (%p7) target = $region5
  $region4: #{tpu_custom_call.1} parent=0 // pred_region
    %s25 = sand.u32 5, 7
    %p26 = scmp.eq.s32.totalorder %s25, 0
    %p27 = pneg %p26
    // Predicated region
    $region17: #{tpu_custom_call.1} parent=4 // pred_check
      _
    $region18: #{tpu_custom_call.1} parent=4 // pred_check_branch
      %29 = sbr.rel (%p26) target = $region20
    $region19: #{tpu_custom_call.1} parent=4 // pred_region
      %s30 = sand.u32 5, 7
      %s31 = ssub.s32 5, %s30
      %s32 = scalar_lea.vmem %s0, %s31
      %s33 = ssub.s32 5, %s30
      %s34 = scalar_lea.vmem %s1, %s33
      %s35 = sshllo.u32 0, %s30
      loop: start=0, step=1, limit=1
      $region21: #{tpu_custom_call.1} parent=19 // loop_pre_header
        _
      $region22: #{tpu_custom_call.1} parent=19 // loop_header
        %s37 = sphi 0, %s41
        %p38 = scmp.ge.s32.totalorder %s37, 1
        %s42 = sphi %s32, %s32
        %s43 = sphi %s34, %s34
      $region23: #{tpu_custom_call.1} parent=19 // loop_header_branch
        %40 = sbr.rel (%p38) target = $region27
      $region24: #{tpu_custom_call.1} parent=19 // loop_body
        %v44 = vld [vmem:[%s42] sm:%s35]
        %45 = vst [vmem:[%s43] sm:%s35] %v44
      $region25: #{tpu_custom_call.1} parent=19 // loop_footer
        %s41 = sadd.s32 1, %s37
      $region26: #{tpu_custom_call.1} parent=19 // loop_footer_branch
        %36 = sbr.rel target = $region22
      $region27: #{tpu_custom_call.1} parent=19 // loop_exit
        _
    $region20: #{tpu_custom_call.1} parent=4 // pred_fallthru
      _
  $region5: #{tpu_custom_call.1} parent=0 // pred_fallthru
    _
  // Predicated region
  $region6: #{tpu_custom_call.1} parent=0 // pred_check
    %p11 = pneg %p7
  $region7: #{tpu_custom_call.1} parent=0 // pred_check_branch
    %13 = sbr.rel (%p11) target = $region9
  $region8: #{tpu_custom_call.1} parent=0 // pred_region
    %s14 = sshllo.u32 0, 5
    loop: start=0, step=1, limit=1
    $region10: #{tpu_custom_call.1} parent=8 // loop_pre_header
      _
    $region11: #{tpu_custom_call.1} parent=8 // loop_header
      %s16 = sphi 0, %s20
      %p17 = scmp.ge.s32.totalorder %s16, 1
      %s21 = sphi %s0, %s0
      %s22 = sphi %s1, %s1
    $region12: #{tpu_custom_call.1} parent=8 // loop_header_branch
      %19 = sbr.rel (%p17) target = $region16
    $region13: #{tpu_custom_call.1} parent=8 // loop_body
      %v23 = vld [vmem:[%s21] sm:%s14]
      %24 = vst [vmem:[%s22] sm:%s14] %v23
    $region14: #{tpu_custom_call.1} parent=8 // loop_footer
      %s20 = sadd.s32 1, %s16
    $region15: #{tpu_custom_call.1} parent=8 // loop_footer_branch
      %15 = sbr.rel target = $region11
    $region16: #{tpu_custom_call.1} parent=8 // loop_exit
      _
  $region9: #{tpu_custom_call.1} parent=0 // pred_fallthru
    _
  // Predicated region
  $region28: #{tpu_custom_call.1} parent=0 // pred_check
    _
  $region29: #{tpu_custom_call.1} parent=0 // pred_check_branch
    %48 = sbr.rel (0) target = $region31
  $region30: #{tpu_custom_call.1} parent=0 // pred_region
    %49 = vsyncadd [#allocation2], 80
  $region31: #{tpu_custom_call.1} parent=0 // pred_fallthru
    _
  %s50 = scalar_lea.vmem %s0, 5
  %s51 = scalar_lea.vmem %s1, 5
  %s52 = scalar_lea.sflag [#allocation2], 1
  %p54 = scmp.lt.u32.totalorder 4, 8
  %p55 = pneg %p54
  // Predicated region
  $region32: #{tpu_custom_call.1} parent=0 // pred_check
    _
  $region33: #{tpu_custom_call.1} parent=0 // pred_check_branch
    %57 = sbr.rel (%p54) target = $region35
  $region34: #{tpu_custom_call.1} parent=0 // pred_region
    %s72 = sand.u32 4, 7
    %p73 = scmp.eq.s32.totalorder %s72, 0
    %p74 = pneg %p73
    // Predicated region
    $region47: #{tpu_custom_call.1} parent=34 // pred_check
      _
    $region48: #{tpu_custom_call.1} parent=34 // pred_check_branch
      %76 = sbr.rel (%p73) target = $region50
    $region49: #{tpu_custom_call.1} parent=34 // pred_region
      %s77 = sand.u32 4, 7
      %s78 = ssub.s32 4, %s77
      %s79 = scalar_lea.vmem %s50, %s78
      %s80 = ssub.s32 4, %s77
      %s81 = scalar_lea.vmem %s51, %s80
      %s82 = sshllo.u32 0, %s77
      loop: start=0, step=1, limit=1
      $region51: #{tpu_custom_call.1} parent=49 // loop_pre_header
        _
      $region52: #{tpu_custom_call.1} parent=49 // loop_header
        %s84 = sphi 0, %s88
        %p85 = scmp.ge.s32.totalorder %s84, 1
        %s89 = sphi %s79, %s79
        %s90 = sphi %s81, %s81
      $region53: #{tpu_custom_call.1} parent=49 // loop_header_branch
        %87 = sbr.rel (%p85) target = $region57
      $region54: #{tpu_custom_call.1} parent=49 // loop_body
        %v91 = vld [vmem:[%s89] sm:%s82]
        %92 = vst [vmem:[%s90] sm:%s82] %v91
      $region55: #{tpu_custom_call.1} parent=49 // loop_footer
        %s88 = sadd.s32 1, %s84
      $region56: #{tpu_custom_call.1} parent=49 // loop_footer_branch
        %83 = sbr.rel target = $region52
      $region57: #{tpu_custom_call.1} parent=49 // loop_exit
        _
    $region50: #{tpu_custom_call.1} parent=34 // pred_fallthru
      _
  $region35: #{tpu_custom_call.1} parent=0 // pred_fallthru
    _
  // Predicated region
  $region36: #{tpu_custom_call.1} parent=0 // pred_check
    %p58 = pneg %p54
  $region37: #{tpu_custom_call.1} parent=0 // pred_check_branch
    %60 = sbr.rel (%p58) target = $region39
  $region38: #{tpu_custom_call.1} parent=0 // pred_region
    %s61 = sshllo.u32 0, 4
    loop: start=0, step=1, limit=1
    $region40: #{tpu_custom_call.1} parent=38 // loop_pre_header
      _
    $region41: #{tpu_custom_call.1} parent=38 // loop_header
      %s63 = sphi 0, %s67
      %p64 = scmp.ge.s32.totalorder %s63, 1
      %s68 = sphi %s50, %s50
      %s69 = sphi %s51, %s51
    $region42: #{tpu_custom_call.1} parent=38 // loop_header_branch
      %66 = sbr.rel (%p64) target = $region46
    $region43: #{tpu_custom_call.1} parent=38 // loop_body
      %v70 = vld [vmem:[%s68] sm:%s61]
      %71 = vst [vmem:[%s69] sm:%s61] %v70
    $region44: #{tpu_custom_call.1} parent=38 // loop_footer
      %s67 = sadd.s32 1, %s63
    $region45: #{tpu_custom_call.1} parent=38 // loop_footer_branch
      %62 = sbr.rel target = $region41
    $region46: #{tpu_custom_call.1} parent=38 // loop_exit
      _
  $region39: #{tpu_custom_call.1} parent=0 // pred_fallthru
    _
  // Predicated region
  $region58: #{tpu_custom_call.1} parent=0 // pred_check
    _
  $region59: #{tpu_custom_call.1} parent=0 // pred_check_branch
    %95 = sbr.rel (0) target = $region61
  $region60: #{tpu_custom_call.1} parent=0 // pred_region
    %96 = vsyncadd %s52, 64
  $region61: #{tpu_custom_call.1} parent=0 // pred_fallthru
    _
  %s97 = scalar_lea.vmem %s0, 9
  %s98 = scalar_lea.vmem %s1, 9
  %s99 = scalar_lea.sflag [#allocation2], 2
  %p101 = scmp.lt.u32.totalorder 4, 8
  %p102 = pneg %p101
  // Predicated region
  $region62: #{tpu_custom_call.1} parent=0 // pred_check
    _
  $region63: #{tpu_custom_call.1} parent=0 // pred_check_branch
    %104 = sbr.rel (%p101) target = $region65
  $region64: #{tpu_custom_call.1} parent=0 // pred_region
    %s119 = sand.u32 4, 7
    %p120 = scmp.eq.s32.totalorder %s119, 0
    %p121 = pneg %p120
    // Predicated region
    $region77: #{tpu_custom_call.1} parent=64 // pred_check
      _
    $region78: #{tpu_custom_call.1} parent=64 // pred_check_branch
      %123 = sbr.rel (%p120) target = $region80
    $region79: #{tpu_custom_call.1} parent=64 // pred_region
      %s124 = sand.u32 4, 7
      %s125 = ssub.s32 4, %s124
      %s126 = scalar_lea.vmem %s97, %s125
      %s127 = ssub.s32 4, %s124
      %s128 = scalar_lea.vmem %s98, %s127
      %s129 = sshllo.u32 0, %s124
      loop: start=0, step=1, limit=1
      $region81: #{tpu_custom_call.1} parent=79 // loop_pre_header
        _
      $region82: #{tpu_custom_call.1} parent=79 // loop_header
        %s131 = sphi 0, %s135
        %p132 = scmp.ge.s32.totalorder %s131, 1
        %s136 = sphi %s126, %s126
        %s137 = sphi %s128, %s128
      $region83: #{tpu_custom_call.1} parent=79 // loop_header_branch
        %134 = sbr.rel (%p132) target = $region87
      $region84: #{tpu_custom_call.1} parent=79 // loop_body
        %v138 = vld [vmem:[%s136] sm:%s129]
        %139 = vst [vmem:[%s137] sm:%s129] %v138
      $region85: #{tpu_custom_call.1} parent=79 // loop_footer
        %s135 = sadd.s32 1, %s131
      $region86: #{tpu_custom_call.1} parent=79 // loop_footer_branch
        %130 = sbr.rel target = $region82
      $region87: #{tpu_custom_call.1} parent=79 // loop_exit
        _
    $region80: #{tpu_custom_call.1} parent=64 // pred_fallthru
      _
  $region65: #{tpu_custom_call.1} parent=0 // pred_fallthru
    _
  // Predicated region
  $region66: #{tpu_custom_call.1} parent=0 // pred_check
    %p105 = pneg %p101
  $region67: #{tpu_custom_call.1} parent=0 // pred_check_branch
    %107 = sbr.rel (%p105) target = $region69
  $region68: #{tpu_custom_call.1} parent=0 // pred_region
    %s108 = sshllo.u32 0, 4
    loop: start=0, step=1, limit=1
    $region70: #{tpu_custom_call.1} parent=68 // loop_pre_header
      _
    $region71: #{tpu_custom_call.1} parent=68 // loop_header
      %s110 = sphi 0, %s114
      %p111 = scmp.ge.s32.totalorder %s110, 1
      %s115 = sphi %s97, %s97
      %s116 = sphi %s98, %s98
    $region72: #{tpu_custom_call.1} parent=68 // loop_header_branch
      %113 = sbr.rel (%p111) target = $region76
    $region73: #{tpu_custom_call.1} parent=68 // loop_body
      %v117 = vld [vmem:[%s115] sm:%s108]
      %118 = vst [vmem:[%s116] sm:%s108] %v117
    $region74: #{tpu_custom_call.1} parent=68 // loop_footer
      %s114 = sadd.s32 1, %s110
    $region75: #{tpu_custom_call.1} parent=68 // loop_footer_branch
      %109 = sbr.rel target = $region71
    $region76: #{tpu_custom_call.1} parent=68 // loop_exit
      _
  $region69: #{tpu_custom_call.1} parent=0 // pred_fallthru
    _
  // Predicated region
  $region88: #{tpu_custom_call.1} parent=0 // pred_check
    _
  $region89: #{tpu_custom_call.1} parent=0 // pred_check_branch
    %142 = sbr.rel (0) target = $region91
  $region90: #{tpu_custom_call.1} parent=0 // pred_region
    %143 = vsyncadd %s99, 64
  $region91: #{tpu_custom_call.1} parent=0 // pred_fallthru
    _
  %s144 = scalar_lea.vmem %s0, 13
  %s145 = scalar_lea.vmem %s1, 13
  %s146 = scalar_lea.sflag [#allocation2], 3
  %p148 = scmp.lt.u32.totalorder 4, 8
  %p149 = pneg %p148
  // Predicated region
  $region92: #{tpu_custom_call.1} parent=0 // pred_check
    _
  $region93: #{tpu_custom_call.1} parent=0 // pred_check_branch
    %151 = sbr.rel (%p148) target = $region95
  $region94: #{tpu_custom_call.1} parent=0 // pred_region
    %s166 = sand.u32 4, 7
    %p167 = scmp.eq.s32.totalorder %s166, 0
    %p168 = pneg %p167
    // Predicated region
    $region107: #{tpu_custom_call.1} parent=94 // pred_check
      _
    $region108: #{tpu_custom_call.1} parent=94 // pred_check_branch
      %170 = sbr.rel (%p167) target = $region110
    $region109: #{tpu_custom_call.1} parent=94 // pred_region
      %s171 = sand.u32 4, 7
      %s172 = ssub.s32 4, %s171
      %s173 = scalar_lea.vmem %s144, %s172
      %s174 = ssub.s32 4, %s171
      %s175 = scalar_lea.vmem %s145, %s174
      %s176 = sshllo.u32 0, %s171
      loop: start=0, step=1, limit=1
      $region111: #{tpu_custom_call.1} parent=109 // loop_pre_header
        _
      $region112: #{tpu_custom_call.1} parent=109 // loop_header
        %s178 = sphi 0, %s182
        %p179 = scmp.ge.s32.totalorder %s178, 1
        %s183 = sphi %s173, %s173
        %s184 = sphi %s175, %s175
      $region113: #{tpu_custom_call.1} parent=109 // loop_header_branch
        %181 = sbr.rel (%p179) target = $region117
      $region114: #{tpu_custom_call.1} parent=109 // loop_body
        %v185 = vld [vmem:[%s183] sm:%s176]
        %186 = vst [vmem:[%s184] sm:%s176] %v185
      $region115: #{tpu_custom_call.1} parent=109 // loop_footer
        %s182 = sadd.s32 1, %s178
      $region116: #{tpu_custom_call.1} parent=109 // loop_footer_branch
        %177 = sbr.rel target = $region112
      $region117: #{tpu_custom_call.1} parent=109 // loop_exit
        _
    $region110: #{tpu_custom_call.1} parent=94 // pred_fallthru
      _
  $region95: #{tpu_custom_call.1} parent=0 // pred_fallthru
    _
  // Predicated region
  $region96: #{tpu_custom_call.1} parent=0 // pred_check
    %p152 = pneg %p148
  $region97: #{tpu_custom_call.1} parent=0 // pred_check_branch
    %154 = sbr.rel (%p152) target = $region99
  $region98: #{tpu_custom_call.1} parent=0 // pred_region
    %s155 = sshllo.u32 0, 4
    loop: start=0, step=1, limit=1
    $region100: #{tpu_custom_call.1} parent=98 // loop_pre_header
      _
    $region101: #{tpu_custom_call.1} parent=98 // loop_header
      %s157 = sphi 0, %s161
      %p158 = scmp.ge.s32.totalorder %s157, 1
      %s162 = sphi %s144, %s144
      %s163 = sphi %s145, %s145
    $region102: #{tpu_custom_call.1} parent=98 // loop_header_branch
      %160 = sbr.rel (%p158) target = $region106
    $region103: #{tpu_custom_call.1} parent=98 // loop_body
      %v164 = vld [vmem:[%s162] sm:%s155]
      %165 = vst [vmem:[%s163] sm:%s155] %v164
    $region104: #{tpu_custom_call.1} parent=98 // loop_footer
      %s161 = sadd.s32 1, %s157
    $region105: #{tpu_custom_call.1} parent=98 // loop_footer_branch
      %156 = sbr.rel target = $region101
    $region106: #{tpu_custom_call.1} parent=98 // loop_exit
      _
  $region99: #{tpu_custom_call.1} parent=0 // pred_fallthru
    _
  // Predicated region
  $region118: #{tpu_custom_call.1} parent=0 // pred_check
    _
  $region119: #{tpu_custom_call.1} parent=0 // pred_check_branch
    %189 = sbr.rel (0) target = $region121
  $region120: #{tpu_custom_call.1} parent=0 // pred_region
    %190 = vsyncadd %s146, 64
  $region121: #{tpu_custom_call.1} parent=0 // pred_fallthru
    _
  %s191 = scalar_lea.vmem %s0, 17
  %s192 = scalar_lea.vmem %s1, 17
  %s193 = scalar_lea.sflag [#allocation2], 4
  %p195 = scmp.lt.u32.totalorder 4, 8
  %p196 = pneg %p195
  // Predicated region
  $region122: #{tpu_custom_call.1} parent=0 // pred_check
    _
  $region123: #{tpu_custom_call.1} parent=0 // pred_check_branch
    %198 = sbr.rel (%p195) target = $region125
  $region124: #{tpu_custom_call.1} parent=0 // pred_region
    %s213 = sand.u32 4, 7
    %p214 = scmp.eq.s32.totalorder %s213, 0
    %p215 = pneg %p214
    // Predicated region
    $region137: #{tpu_custom_call.1} parent=124 // pred_check
      _
    $region138: #{tpu_custom_call.1} parent=124 // pred_check_branch
      %217 = sbr.rel (%p214) target = $region140
    $region139: #{tpu_custom_call.1} parent=124 // pred_region
      %s218 = sand.u32 4, 7
      %s219 = ssub.s32 4, %s218
      %s220 = scalar_lea.vmem %s191, %s219
      %s221 = ssub.s32 4, %s218
      %s222 = scalar_lea.vmem %s192, %s221
      %s223 = sshllo.u32 0, %s218
      loop: start=0, step=1, limit=1
      $region141: #{tpu_custom_call.1} parent=139 // loop_pre_header
        _
      $region142: #{tpu_custom_call.1} parent=139 // loop_header
        %s225 = sphi 0, %s229
        %p226 = scmp.ge.s32.totalorder %s225, 1
        %s230 = sphi %s220, %s220
        %s231 = sphi %s222, %s222
      $region143: #{tpu_custom_call.1} parent=139 // loop_header_branch
        %228 = sbr.rel (%p226) target = $region147
      $region144: #{tpu_custom_call.1} parent=139 // loop_body
        %v232 = vld [vmem:[%s230] sm:%s223]
        %233 = vst [vmem:[%s231] sm:%s223] %v232
      $region145: #{tpu_custom_call.1} parent=139 // loop_footer
        %s229 = sadd.s32 1, %s225
      $region146: #{tpu_custom_call.1} parent=139 // loop_footer_branch
        %224 = sbr.rel target = $region142
      $region147: #{tpu_custom_call.1} parent=139 // loop_exit
        _
    $region140: #{tpu_custom_call.1} parent=124 // pred_fallthru
      _
  $region125: #{tpu_custom_call.1} parent=0 // pred_fallthru
    _
  // Predicated region
  $region126: #{tpu_custom_call.1} parent=0 // pred_check
    %p199 = pneg %p195
  $region127: #{tpu_custom_call.1} parent=0 // pred_check_branch
    %201 = sbr.rel (%p199) target = $region129
  $region128: #{tpu_custom_call.1} parent=0 // pred_region
    %s202 = sshllo.u32 0, 4
    loop: start=0, step=1, limit=1
    $region130: #{tpu_custom_call.1} parent=128 // loop_pre_header
      _
    $region131: #{tpu_custom_call.1} parent=128 // loop_header
      %s204 = sphi 0, %s208
      %p205 = scmp.ge.s32.totalorder %s204, 1
      %s209 = sphi %s191, %s191
      %s210 = sphi %s192, %s192
    $region132: #{tpu_custom_call.1} parent=128 // loop_header_branch
      %207 = sbr.rel (%p205) target = $region136
    $region133: #{tpu_custom_call.1} parent=128 // loop_body
      %v211 = vld [vmem:[%s209] sm:%s202]
      %212 = vst [vmem:[%s210] sm:%s202] %v211
    $region134: #{tpu_custom_call.1} parent=128 // loop_footer
      %s208 = sadd.s32 1, %s204
    $region135: #{tpu_custom_call.1} parent=128 // loop_footer_branch
      %203 = sbr.rel target = $region131
    $region136: #{tpu_custom_call.1} parent=128 // loop_exit
      _
  $region129: #{tpu_custom_call.1} parent=0 // pred_fallthru
    _
  // Predicated region
  $region148: #{tpu_custom_call.1} parent=0 // pred_check
    _
  $region149: #{tpu_custom_call.1} parent=0 // pred_check_branch
    %236 = sbr.rel (0) target = $region151
  $region150: #{tpu_custom_call.1} parent=0 // pred_region
    %237 = vsyncadd %s193, 64
  $region151: #{tpu_custom_call.1} parent=0 // pred_fallthru
    _
  %s238 = scalar_lea.vmem %s0, 21
  %s239 = scalar_lea.vmem %s1, 21
  %s240 = scalar_lea.sflag [#allocation2], 5
  %p242 = scmp.lt.u32.totalorder 4, 8
  %p243 = pneg %p242
  // Predicated region
  $region152: #{tpu_custom_call.1} parent=0 // pred_check
    _
  $region153: #{tpu_custom_call.1} parent=0 // pred_check_branch
    %245 = sbr.rel (%p242) target = $region155
  $region154: #{tpu_custom_call.1} parent=0 // pred_region
    %s260 = sand.u32 4, 7
    %p261 = scmp.eq.s32.totalorder %s260, 0
    %p262 = pneg %p261
    // Predicated region
    $region167: #{tpu_custom_call.1} parent=154 // pred_check
      _
    $region168: #{tpu_custom_call.1} parent=154 // pred_check_branch
      %264 = sbr.rel (%p261) target = $region170
    $region169: #{tpu_custom_call.1} parent=154 // pred_region
      %s265 = sand.u32 4, 7
      %s266 = ssub.s32 4, %s265
      %s267 = scalar_lea.vmem %s238, %s266
      %s268 = ssub.s32 4, %s265
      %s269 = scalar_lea.vmem %s239, %s268
      %s270 = sshllo.u32 0, %s265
      loop: start=0, step=1, limit=1
      $region171: #{tpu_custom_call.1} parent=169 // loop_pre_header
        _
      $region172: #{tpu_custom_call.1} parent=169 // loop_header
        %s272 = sphi 0, %s276
        %p273 = scmp.ge.s32.totalorder %s272, 1
        %s277 = sphi %s267, %s267
        %s278 = sphi %s269, %s269
      $region173: #{tpu_custom_call.1} parent=169 // loop_header_branch
        %275 = sbr.rel (%p273) target = $region177
      $region174: #{tpu_custom_call.1} parent=169 // loop_body
        %v279 = vld [vmem:[%s277] sm:%s270]
        %280 = vst [vmem:[%s278] sm:%s270] %v279
      $region175: #{tpu_custom_call.1} parent=169 // loop_footer
        %s276 = sadd.s32 1, %s272
      $region176: #{tpu_custom_call.1} parent=169 // loop_footer_branch
        %271 = sbr.rel target = $region172
      $region177: #{tpu_custom_call.1} parent=169 // loop_exit
        _
    $region170: #{tpu_custom_call.1} parent=154 // pred_fallthru
      _
  $region155: #{tpu_custom_call.1} parent=0 // pred_fallthru
    _
  // Predicated region
  $region156: #{tpu_custom_call.1} parent=0 // pred_check
    %p246 = pneg %p242
  $region157: #{tpu_custom_call.1} parent=0 // pred_check_branch
    %248 = sbr.rel (%p246) target = $region159
  $region158: #{tpu_custom_call.1} parent=0 // pred_region
    %s249 = sshllo.u32 0, 4
    loop: start=0, step=1, limit=1
    $region160: #{tpu_custom_call.1} parent=158 // loop_pre_header
      _
    $region161: #{tpu_custom_call.1} parent=158 // loop_header
      %s251 = sphi 0, %s255
      %p252 = scmp.ge.s32.totalorder %s251, 1
      %s256 = sphi %s238, %s238
      %s257 = sphi %s239, %s239
    $region162: #{tpu_custom_call.1} parent=158 // loop_header_branch
      %254 = sbr.rel (%p252) target = $region166
    $region163: #{tpu_custom_call.1} parent=158 // loop_body
      %v258 = vld [vmem:[%s256] sm:%s249]
      %259 = vst [vmem:[%s257] sm:%s249] %v258
    $region164: #{tpu_custom_call.1} parent=158 // loop_footer
      %s255 = sadd.s32 1, %s251
    $region165: #{tpu_custom_call.1} parent=158 // loop_footer_branch
      %250 = sbr.rel target = $region161
    $region166: #{tpu_custom_call.1} parent=158 // loop_exit
      _
  $region159: #{tpu_custom_call.1} parent=0 // pred_fallthru
    _
  // Predicated region
  $region178: #{tpu_custom_call.1} parent=0 // pred_check
    _
  $region179: #{tpu_custom_call.1} parent=0 // pred_check_branch
    %283 = sbr.rel (0) target = $region181
  $region180: #{tpu_custom_call.1} parent=0 // pred_region
    %284 = vsyncadd %s240, 64
  $region181: #{tpu_custom_call.1} parent=0 // pred_fallthru
    _
  %s285 = scalar_lea.vmem %s0, 25
  %s286 = scalar_lea.vmem %s1, 25
  %s287 = scalar_lea.sflag [#allocation2], 6
  %p289 = scmp.lt.u32.totalorder 4, 8
  %p290 = pneg %p289
  // Predicated region
  $region182: #{tpu_custom_call.1} parent=0 // pred_check
    _
  $region183: #{tpu_custom_call.1} parent=0 // pred_check_branch
    %292 = sbr.rel (%p289) target = $region185
  $region184: #{tpu_custom_call.1} parent=0 // pred_region
    %s307 = sand.u32 4, 7
    %p308 = scmp.eq.s32.totalorder %s307, 0
    %p309 = pneg %p308
    // Predicated region
    $region197: #{tpu_custom_call.1} parent=184 // pred_check
      _
    $region198: #{tpu_custom_call.1} parent=184 // pred_check_branch
      %311 = sbr.rel (%p308) target = $region200
    $region199: #{tpu_custom_call.1} parent=184 // pred_region
      %s312 = sand.u32 4, 7
      %s313 = ssub.s32 4, %s312
      %s314 = scalar_lea.vmem %s285, %s313
      %s315 = ssub.s32 4, %s312
      %s316 = scalar_lea.vmem %s286, %s315
      %s317 = sshllo.u32 0, %s312
      loop: start=0, step=1, limit=1
      $region201: #{tpu_custom_call.1} parent=199 // loop_pre_header
        _
      $region202: #{tpu_custom_call.1} parent=199 // loop_header
        %s319 = sphi 0, %s323
        %p320 = scmp.ge.s32.totalorder %s319, 1
        %s324 = sphi %s314, %s314
        %s325 = sphi %s316, %s316
      $region203: #{tpu_custom_call.1} parent=199 // loop_header_branch
        %322 = sbr.rel (%p320) target = $region207
      $region204: #{tpu_custom_call.1} parent=199 // loop_body
        %v326 = vld [vmem:[%s324] sm:%s317]
        %327 = vst [vmem:[%s325] sm:%s317] %v326
      $region205: #{tpu_custom_call.1} parent=199 // loop_footer
        %s323 = sadd.s32 1, %s319
      $region206: #{tpu_custom_call.1} parent=199 // loop_footer_branch
        %318 = sbr.rel target = $region202
      $region207: #{tpu_custom_call.1} parent=199 // loop_exit
        _
    $region200: #{tpu_custom_call.1} parent=184 // pred_fallthru
      _
  $region185: #{tpu_custom_call.1} parent=0 // pred_fallthru
    _
  // Predicated region
  $region186: #{tpu_custom_call.1} parent=0 // pred_check
    %p293 = pneg %p289
  $region187: #{tpu_custom_call.1} parent=0 // pred_check_branch
    %295 = sbr.rel (%p293) target = $region189
  $region188: #{tpu_custom_call.1} parent=0 // pred_region
    %s296 = sshllo.u32 0, 4
    loop: start=0, step=1, limit=1
    $region190: #{tpu_custom_call.1} parent=188 // loop_pre_header
      _
    $region191: #{tpu_custom_call.1} parent=188 // loop_header
      %s298 = sphi 0, %s302
      %p299 = scmp.ge.s32.totalorder %s298, 1
      %s303 = sphi %s285, %s285
      %s304 = sphi %s286, %s286
    $region192: #{tpu_custom_call.1} parent=188 // loop_header_branch
      %301 = sbr.rel (%p299) target = $region196
    $region193: #{tpu_custom_call.1} parent=188 // loop_body
      %v305 = vld [vmem:[%s303] sm:%s296]
      %306 = vst [vmem:[%s304] sm:%s296] %v305
    $region194: #{tpu_custom_call.1} parent=188 // loop_footer
      %s302 = sadd.s32 1, %s298
    $region195: #{tpu_custom_call.1} parent=188 // loop_footer_branch
      %297 = sbr.rel target = $region191
    $region196: #{tpu_custom_call.1} parent=188 // loop_exit
      _
  $region189: #{tpu_custom_call.1} parent=0 // pred_fallthru
    _
  // Predicated region
  $region208: #{tpu_custom_call.1} parent=0 // pred_check
    _
  $region209: #{tpu_custom_call.1} parent=0 // pred_check_branch
    %330 = sbr.rel (0) target = $region211
  $region210: #{tpu_custom_call.1} parent=0 // pred_region
    %331 = vsyncadd %s287, 64
  $region211: #{tpu_custom_call.1} parent=0 // pred_fallthru
    _
  %s332 = scalar_lea.vmem %s0, 29
  %s333 = scalar_lea.vmem %s1, 29
  %s334 = scalar_lea.sflag [#allocation2], 7
  %p336 = scmp.lt.u32.totalorder 4, 8
  %p337 = pneg %p336
  // Predicated region
  $region212: #{tpu_custom_call.1} parent=0 // pred_check
    _
  $region213: #{tpu_custom_call.1} parent=0 // pred_check_branch
    %339 = sbr.rel (%p336) target = $region215
  $region214: #{tpu_custom_call.1} parent=0 // pred_region
    %s354 = sand.u32 4, 7
    %p355 = scmp.eq.s32.totalorder %s354, 0
    %p356 = pneg %p355
    // Predicated region
    $region227: #{tpu_custom_call.1} parent=214 // pred_check
      _
    $region228: #{tpu_custom_call.1} parent=214 // pred_check_branch
      %358 = sbr.rel (%p355) target = $region230
    $region229: #{tpu_custom_call.1} parent=214 // pred_region
      %s359 = sand.u32 4, 7
      %s360 = ssub.s32 4, %s359
      %s361 = scalar_lea.vmem %s332, %s360
      %s362 = ssub.s32 4, %s359
      %s363 = scalar_lea.vmem %s333, %s362
      %s364 = sshllo.u32 0, %s359
      loop: start=0, step=1, limit=1
      $region231: #{tpu_custom_call.1} parent=229 // loop_pre_header
        _
      $region232: #{tpu_custom_call.1} parent=229 // loop_header
        %s366 = sphi 0, %s370
        %p367 = scmp.ge.s32.totalorder %s366, 1
        %s371 = sphi %s361, %s361
        %s372 = sphi %s363, %s363
      $region233: #{tpu_custom_call.1} parent=229 // loop_header_branch
        %369 = sbr.rel (%p367) target = $region237
      $region234: #{tpu_custom_call.1} parent=229 // loop_body
        %v373 = vld [vmem:[%s371] sm:%s364]
        %374 = vst [vmem:[%s372] sm:%s364] %v373
      $region235: #{tpu_custom_call.1} parent=229 // loop_footer
        %s370 = sadd.s32 1, %s366
      $region236: #{tpu_custom_call.1} parent=229 // loop_footer_branch
        %365 = sbr.rel target = $region232
      $region237: #{tpu_custom_call.1} parent=229 // loop_exit
        _
    $region230: #{tpu_custom_call.1} parent=214 // pred_fallthru
      _
  $region215: #{tpu_custom_call.1} parent=0 // pred_fallthru
    _
  // Predicated region
  $region216: #{tpu_custom_call.1} parent=0 // pred_check
    %p340 = pneg %p336
  $region217: #{tpu_custom_call.1} parent=0 // pred_check_branch
    %342 = sbr.rel (%p340) target = $region219
  $region218: #{tpu_custom_call.1} parent=0 // pred_region
    %s343 = sshllo.u32 0, 4
    loop: start=0, step=1, limit=1
    $region220: #{tpu_custom_call.1} parent=218 // loop_pre_header
      _
    $region221: #{tpu_custom_call.1} parent=218 // loop_header
      %s345 = sphi 0, %s349
      %p346 = scmp.ge.s32.totalorder %s345, 1
      %s350 = sphi %s332, %s332
      %s351 = sphi %s333, %s333
    $region222: #{tpu_custom_call.1} parent=218 // loop_header_branch
      %348 = sbr.rel (%p346) target = $region226
    $region223: #{tpu_custom_call.1} parent=218 // loop_body
      %v352 = vld [vmem:[%s350] sm:%s343]
      %353 = vst [vmem:[%s351] sm:%s343] %v352
    $region224: #{tpu_custom_call.1} parent=218 // loop_footer
      %s349 = sadd.s32 1, %s345
    $region225: #{tpu_custom_call.1} parent=218 // loop_footer_branch
      %344 = sbr.rel target = $region221
    $region226: #{tpu_custom_call.1} parent=218 // loop_exit
      _
  $region219: #{tpu_custom_call.1} parent=0 // pred_fallthru
    _
  // Predicated region
  $region238: #{tpu_custom_call.1} parent=0 // pred_check
    _
  $region239: #{tpu_custom_call.1} parent=0 // pred_check_branch
    %377 = sbr.rel (0) target = $region241
  $region240: #{tpu_custom_call.1} parent=0 // pred_region
    %378 = vsyncadd %s334, 64
  $region241: #{tpu_custom_call.1} parent=0 // pred_fallthru
    _
  %s379 = smul.u32 5, 1
  %s380 = sshll.u32 %s379, 4
  %381 = dma.done [#allocation2], %s380
  %s382 = smul.u32 4, 1
  %s383 = sshll.u32 %s382, 4
  %384 = dma.done %s52, %s383
  %s385 = sshll.u32 %s382, 4
  %386 = dma.done %s99, %s385
  %s387 = sshll.u32 %s382, 4
  %388 = dma.done %s146, %s387
  %s389 = sshll.u32 %s382, 4
  %390 = dma.done %s193, %s389
  %s391 = sshll.u32 %s382, 4
  %392 = dma.done %s240, %s391
  %s393 = sshll.u32 %s382, 4
  %394 = dma.done %s287, %s393
  %s395 = sshll.u32 %s382, 4
  %396 = dma.done %s334, %s395
  %397 = vsyncmov [#allocation2]
  %s398 = vpop.sfrf %397
  %p399 = scmp.eq.s32.totalorder %s398, 0
  %p400 = pneg %p399
  %402 = shalt.err (%p400)
  %s403 = scalar_lea.sflag [#allocation2], 1
  %404 = vsyncmov %s403
  %s405 = vpop.sfrf %404
  %p406 = scmp.eq.s32.totalorder %s405, 0
  %p407 = pneg %p406
  %409 = shalt.err (%p407)
  %s410 = scalar_lea.sflag [#allocation2], 2
  %411 = vsyncmov %s410
  %s412 = vpop.sfrf %411
  %p413 = scmp.eq.s32.totalorder %s412, 0
  %p414 = pneg %p413
  %416 = shalt.err (%p414)
  %s417 = scalar_lea.sflag [#allocation2], 3
  %418 = vsyncmov %s417
  %s419 = vpop.sfrf %418
  %p420 = scmp.eq.s32.totalorder %s419, 0
  %p421 = pneg %p420
  %423 = shalt.err (%p421)
  %s424 = scalar_lea.sflag [#allocation2], 4
  %425 = vsyncmov %s424
  %s426 = vpop.sfrf %425
  %p427 = scmp.eq.s32.totalorder %s426, 0
  %p428 = pneg %p427
  %430 = shalt.err (%p428)
  %s431 = scalar_lea.sflag [#allocation2], 5
  %432 = vsyncmov %s431
  %s433 = vpop.sfrf %432
  %p434 = scmp.eq.s32.totalorder %s433, 0
  %p435 = pneg %p434
  %437 = shalt.err (%p435)
  %s438 = scalar_lea.sflag [#allocation2], 6
  %439 = vsyncmov %s438
  %s440 = vpop.sfrf %439
  %p441 = scmp.eq.s32.totalorder %s440, 0
  %p442 = pneg %p441
  %444 = shalt.err (%p442)
  %s445 = scalar_lea.sflag [#allocation2], 7
  %446 = vsyncmov %s445
  %s447 = vpop.sfrf %446
  %p448 = scmp.eq.s32.totalorder %s447, 0
  %p449 = pneg %p448
  %451 = shalt.err (%p449)

</llo_original>
